<compile_context>
chip_gen: v7x
topology: tpu7x:2x2x1
jax: 0.10.0
libtpu: 0.0.40
codegen_flags: <defaults>
</compile_context>

<pallas_src>
import functools

import jax
import jax.numpy as jnp
from jax.experimental import pallas as pl
from jax.experimental.pallas import tpu as pltpu


def _round_up(x, m):
    return (x + m - 1) // m * m


def comparison_kernel(x1_ref, x2_ref, wt_ref, bt_ref, g_ref, bmean_ref, out_ref,
                      *, eps):
    # Elementwise difference on the batch tile (VPU), [TB, D]
    d = x1_ref[...] - x2_ref[...]

    # v^T = W @ d^T (contract the D axis of both operands) -> [F, TB].
    # Batch lands on lanes; feature axis on sublanes.  Same lowering as
    # pl.dot(wt, d, trans_b=True): MXU transposed-operand path, no
    # materialized transpose of the big d tile.
    vt = jax.lax.dot_general(
        wt_ref[...], d,
        dimension_numbers=(((1,), (1,)), ((), ())),
        preferred_element_type=jnp.float32,
    ) + bt_ref[...]                                        # + bias column [F, 1]

    # LayerNorm statistics over the feature (sublane) axis.
    mu = jnp.mean(vt, axis=0, keepdims=True)               # [1, TB]
    c = vt - mu                                            # centered, [F, TB]
    var = jnp.mean(c * c, axis=0, keepdims=True)           # [1, TB] (biased var)

    # Fused LayerNorm-affine + feature mean + 1/temperature:
    #   ip = rsqrt(var+eps) * sum(c * gamma/(F*T)) + mean(beta)/T
    # gamma is pre-scaled by 1/(F*T) in the wrapper; mean(beta)/T arrives as
    # an SMEM scalar.
    num = jnp.sum(c * g_ref[...], axis=0, keepdims=True)   # [1, TB]
    ip = num * jax.lax.rsqrt(var + eps) + bmean_ref[0, 0]  # [1, TB]

    # Lane-dense store of the per-row result.
    out_ref[...] = jax.nn.sigmoid(ip)


def comparison_model(x1, x2, w, b, gamma, beta, *, temperature=1.0, eps=1e-5,
                     block_b=8192):
    """x1, x2: [B, D]; w: [D, F]; b/gamma/beta: [1, F]. Returns [B, 1]."""
    B, D = x1.shape
    F = w.shape[1]

    # --- Batch tiling ------------------------------------------------------
    # TB is always a multiple of 128 (lane-dense output stores, (8,128) rule).
    # Aim for nb >= 2 so the "parallel" axis splits across both TCs on v7x,
    # while capping the tile at block_b (VMEM: a (TB,32) f32 block pads to
    # TB*128*4 bytes; TB=8192 double-buffered x 2 inputs = 16 MiB).
    block_b = max(128, _round_up(int(block_b), 128))
    TB = min(block_b, max(128, _round_up(pl.cdiv(B, 2), 128)))
    nb = pl.cdiv(B, TB)
    Bp = nb * TB
    if Bp != B:
        pad = Bp - B
        x1 = jnp.pad(x1, ((0, pad), (0, 0)))
        x2 = jnp.pad(x2, ((0, pad), (0, 0)))

    # --- One-time parameter re-layouts / constant folding (wrapper side) ---
    wt = w.T.astype(jnp.float32)                            # [F, D]
    bt = b.reshape(F, 1).astype(jnp.float32)                # [F, 1]
    scale = 1.0 / (float(F) * float(temperature))
    gt = gamma.reshape(F, 1).astype(jnp.float32) * scale    # gamma/(F*T), [F, 1]
    bmean = (jnp.mean(beta.astype(jnp.float32))
             / jnp.float32(temperature)).reshape(1, 1)      # mean(beta)/T, SMEM scalar

    kern = functools.partial(comparison_kernel, eps=float(eps))

    out_t = pl.pallas_call(
        kern,
        out_shape=jax.ShapeDtypeStruct((1, Bp), jnp.float32),
        grid_spec=pltpu.PrefetchScalarGridSpec(
            num_scalar_prefetch=0,
            grid=(nb,),
            in_specs=[
                pl.BlockSpec((TB, D), lambda i: (i, 0)),    # x1 batch tile
                pl.BlockSpec((TB, D), lambda i: (i, 0)),    # x2 batch tile
                pl.BlockSpec((F, D), lambda i: (0, 0)),     # W^T (resident)
                pl.BlockSpec((F, 1), lambda i: (0, 0)),     # bias column
                pl.BlockSpec((F, 1), lambda i: (0, 0)),     # gamma/(F*T) column
                pl.BlockSpec(memory_space=pltpu.MemorySpace.SMEM),  # mean(beta)/T
            ],
            out_specs=pl.BlockSpec((1, TB), lambda i: (0, i)),  # lane-dense out
        ),
        compiler_params=pltpu.CompilerParams(
            dimension_semantics=("parallel",),      # batch tiles independent
            vmem_limit_bytes=32 * 1024 * 1024,      # safe on v5e/v6e/v7x
        ),
        cost_estimate=pl.CostEstimate(
            flops=2 * Bp * D * F + 10 * Bp * F,
            transcendentals=2 * Bp,                 # rsqrt + sigmoid per row
            bytes_accessed=(2 * Bp * D + F * D + 2 * F + Bp + 1) * 4,
        ),
    )(x1, x2, wt, bt, gt, bmean)

    return out_t[0, :B].reshape(B, 1)


if __name__ == "__main__":
    # Small shapes consistent with the module: input_dim=32 -> feature_size=16
    B = 256
    input_dim = 32
    feature_size = input_dim // 2
    temperature = 1.0

    key = jax.random.PRNGKey(0)
    k1, k2, kw, kb = jax.random.split(key, 4)

    x1 = jax.random.normal(k1, (B, input_dim), dtype=jnp.float32)
    x2 = jax.random.normal(k2, (B, input_dim), dtype=jnp.float32)

    # nn.Linear-style uniform init; LayerNorm affine = ones/zeros.
    bound = 1.0 / jnp.sqrt(jnp.float32(input_dim))
    w = jax.random.uniform(kw, (input_dim, feature_size), dtype=jnp.float32,
                           minval=-bound, maxval=bound)
    b = jax.random.uniform(kb, (1, feature_size), dtype=jnp.float32,
                           minval=-bound, maxval=bound)
    gamma = jnp.ones((1, feature_size), dtype=jnp.float32)
    beta = jnp.zeros((1, feature_size), dtype=jnp.float32)

    out = comparison_model(x1, x2, w, b, gamma, beta, temperature=temperature)
    out = jax.block_until_ready(out)

    # Reference check in plain JAX (unfused math, same semantics as PyTorch).
    d = x1 - x2
    v = d @ w + b
    mu = v.mean(-1, keepdims=True)
    var = ((v - mu) ** 2).mean(-1, keepdims=True)
    v_ln = (v - mu) / jnp.sqrt(var + 1e-5) * gamma + beta
    ref = jax.nn.sigmoid(v_ln.mean(-1, keepdims=True) / temperature)

    assert out.shape == (B, 1)
    assert jnp.allclose(out, ref, atol=1e-5, rtol=1e-5)

    print("KERNEL_OK")
</pallas_src>

<mosaic_0001>
module attributes {stable_mosaic.version = 11 : i64} {
  func.func @comparison_kernel(%arg0: i32, %arg1: memref<128x32xf32, #tpu.memory_space<vmem>>, %arg2: memref<128x32xf32, #tpu.memory_space<vmem>>, %arg3: memref<16x32xf32, #tpu.memory_space<vmem>>, %arg4: memref<16x1xf32, #tpu.memory_space<vmem>>, %arg5: memref<16x1xf32, #tpu.memory_space<vmem>>, %arg6: memref<1x1xf32, #tpu.memory_space<smem>>, %arg7: memref<1x128xf32, #tpu.memory_space<vmem>>) attributes {dimension_semantics = [#tpu.dimension_semantics<parallel>], iteration_bounds = array<i64: 2>, scalar_prefetch = 0 : i64, scratch_operands = 0 : i64, tpu.core_type = #tpu.core_type<tc>, window_params = [{transform_indices = @transform_0, window_bounds = array<i64: 128, 32>}, {transform_indices = @transform_1, window_bounds = array<i64: 128, 32>}, {pipeline_mode = #tpu.pipeline_mode<synchronous>, transform_indices = @transform_2, window_bounds = array<i64: 16, 32>}, {pipeline_mode = #tpu.pipeline_mode<synchronous>, transform_indices = @transform_3, window_bounds = array<i64: 16, 1>}, {pipeline_mode = #tpu.pipeline_mode<synchronous>, transform_indices = @transform_4, window_bounds = array<i64: 16, 1>}, {transform_indices = @transform_5, window_bounds = array<i64: 1, 1>}, {transform_indices = @transform_6, window_bounds = array<i64: 1, 128>}]} {
    %c0 = arith.constant 0 : index
    %c0_0 = arith.constant 0 : index
    %0 = vector.load %arg1[%c0, %c0_0] : memref<128x32xf32, #tpu.memory_space<vmem>>, vector<128x32xf32>
    %c0_1 = arith.constant 0 : index
    %c0_2 = arith.constant 0 : index
    %1 = vector.load %arg2[%c0_1, %c0_2] : memref<128x32xf32, #tpu.memory_space<vmem>>, vector<128x32xf32>
    %2 = arith.subf %0, %1 : vector<128x32xf32>
    %c0_3 = arith.constant 0 : index
    %c0_4 = arith.constant 0 : index
    %3 = vector.load %arg3[%c0_3, %c0_4] : memref<16x32xf32, #tpu.memory_space<vmem>>, vector<16x32xf32>
    %cst = arith.constant dense<0.000000e+00> : vector<16x128xf32>
    %4 = tpu.matmul %3, %2, %cst {dimension_numbers = #tpu.dot_dimension_numbers<[1], [1], [0], [0], [0, 0, 1, 0], [], []>} : vector<16x32xf32>, vector<128x32xf32>, vector<16x128xf32> -> vector<16x128xf32>
    %c0_5 = arith.constant 0 : index
    %c0_6 = arith.constant 0 : index
    %5 = vector.load %arg4[%c0_5, %c0_6] : memref<16x1xf32, #tpu.memory_space<vmem>>, vector<16x1xf32>
    %6 = vector.broadcast %5 : vector<16x1xf32> to vector<16x128xf32>
    %7 = arith.addf %4, %6 : vector<16x128xf32>
    %cst_7 = arith.constant dense<0.000000e+00> : vector<128xf32>
    %8 = vector.multi_reduction <add>, %7, %cst_7 [0] : vector<16x128xf32> to vector<128xf32>
    %9 = vector.shape_cast %8 : vector<128xf32> to vector<1x128xf32>
    %cst_8 = arith.constant 1.600000e+01 : f32
    %10 = vector.broadcast %cst_8 : f32 to vector<1x128xf32>
    %11 = arith.divf %9, %10 : vector<1x128xf32>
    %12 = vector.broadcast %11 : vector<1x128xf32> to vector<16x128xf32>
    %13 = arith.subf %7, %12 : vector<16x128xf32>
    %14 = arith.mulf %13, %13 : vector<16x128xf32>
    %cst_9 = arith.constant dense<0.000000e+00> : vector<128xf32>
    %15 = vector.multi_reduction <add>, %14, %cst_9 [0] : vector<16x128xf32> to vector<128xf32>
    %16 = vector.shape_cast %15 : vector<128xf32> to vector<1x128xf32>
    %cst_10 = arith.constant 1.600000e+01 : f32
    %17 = vector.broadcast %cst_10 : f32 to vector<1x128xf32>
    %18 = arith.divf %16, %17 : vector<1x128xf32>
    %c0_11 = arith.constant 0 : index
    %c0_12 = arith.constant 0 : index
    %19 = vector.load %arg5[%c0_11, %c0_12] : memref<16x1xf32, #tpu.memory_space<vmem>>, vector<16x1xf32>
    %20 = vector.broadcast %19 : vector<16x1xf32> to vector<16x128xf32>
    %21 = arith.mulf %13, %20 : vector<16x128xf32>
    %cst_13 = arith.constant dense<0.000000e+00> : vector<128xf32>
    %22 = vector.multi_reduction <add>, %21, %cst_13 [0] : vector<16x128xf32> to vector<128xf32>
    %23 = vector.shape_cast %22 : vector<128xf32> to vector<1x128xf32>
    %cst_14 = arith.constant 9.99999974E-6 : f32
    %24 = vector.broadcast %cst_14 : f32 to vector<1x128xf32>
    %25 = arith.addf %18, %24 : vector<1x128xf32>
    %26 = math.rsqrt %25 : vector<1x128xf32>
    %27 = arith.mulf %23, %26 : vector<1x128xf32>
    %c0_15 = arith.constant 0 : index
    %c0_16 = arith.constant 0 : index
    %28 = memref.load %arg6[%c0_15, %c0_16] : memref<1x1xf32, #tpu.memory_space<smem>>
    %29 = vector.broadcast %28 : f32 to vector<1x128xf32>
    %30 = arith.addf %27, %29 : vector<1x128xf32>
    %31 = arith.negf %30 : vector<1x128xf32>
    %32 = math.exp %31 : vector<1x128xf32>
    %cst_17 = arith.constant 1.000000e+00 : f32
    %33 = vector.broadcast %cst_17 : f32 to vector<1x128xf32>
    %34 = arith.addf %33, %32 : vector<1x128xf32>
    %35 = arith.divf %33, %34 : vector<1x128xf32>
    %c0_18 = arith.constant 0 : index
    %c0_19 = arith.constant 0 : index
    %36 = vector.load %arg7[%c0_18, %c0_19] : memref<1x128xf32, #tpu.memory_space<vmem>>, vector<1x128xf32>
    tpu.vector_store %arg7[%c0_18, %c0_19], %35 {strides = array<i32>} : memref<1x128xf32, #tpu.memory_space<vmem>>, vector<1x128xf32>,
    return
  }
  func.func @transform_0(%arg0: i32) -> (i32, i32) {
    %c0_i32 = arith.constant 0 : i32
    %c0_i32_0 = arith.constant 0 : i32
    return %arg0, %c0_i32 : i32, i32
  }
  func.func @transform_1(%arg0: i32) -> (i32, i32) {
    %c0_i32 = arith.constant 0 : i32
    %c0_i32_0 = arith.constant 0 : i32
    return %arg0, %c0_i32 : i32, i32
  }
  func.func @transform_2(%arg0: i32) -> (i32, i32) {
    %c0_i32 = arith.constant 0 : i32
    %c0_i32_0 = arith.constant 0 : i32
    %c0_i32_1 = arith.constant 0 : i32
    return %c0_i32, %c0_i32_0 : i32, i32
  }
  func.func @transform_3(%arg0: i32) -> (i32, i32) {
    %c0_i32 = arith.constant 0 : i32
    %c0_i32_0 = arith.constant 0 : i32
    %c0_i32_1 = arith.constant 0 : i32
    return %c0_i32, %c0_i32_0 : i32, i32
  }
  func.func @transform_4(%arg0: i32) -> (i32, i32) {
    %c0_i32 = arith.constant 0 : i32
    %c0_i32_0 = arith.constant 0 : i32
    %c0_i32_1 = arith.constant 0 : i32
    return %c0_i32, %c0_i32_0 : i32, i32
  }
  func.func @transform_5(%arg0: i32) -> (i32, i32) {
    %c0_i32 = arith.constant 0 : i32
    %c0_i32_0 = arith.constant 0 : i32
    %c0_i32_1 = arith.constant 0 : i32
    return %c0_i32, %c0_i32_0 : i32, i32
  }
  func.func @transform_6(%arg0: i32) -> (i32, i32) {
    %c0_i32 = arith.constant 0 : i32
    %c0_i32_0 = arith.constant 0 : i32
    return %c0_i32, %arg0 : i32, i32
  }
}

</mosaic_0001>

<llo_original>
// kernel: tpu_custom_call.1
$region0: #{tpu_custom_call.1}
  #allocation0 [shape = 'u32[]', space=smem, size = 0x4, offset = 0x4, fixed_abs, tag = 'smem constant byte address 0x4 - core index']
  #allocation1 [shape = 'u32[144,128]{1,0:T(1,128)}', space=vmem, size = 0x12000, scoped, tag = 'internal scratch']
  #allocation2 [shape = 'f32[1,1]{1,0:T(1,128)S(6)}', space=smem, size = 0x200, scoped, tag = 'scoped memory for tpu_custom_call.1']
  %s0 = inlined_call_operand.vmem [shape: f32[256,32], index: 0, kind: input, shape index: {}]
  %s1 = inlined_call_operand.vmem [shape: f32[256,32], index: 1, kind: input, shape index: {}]
  %s2 = inlined_call_operand.vmem [shape: f32[16,32], index: 2, kind: input, shape index: {}]
  %s3 = inlined_call_operand.vmem [shape: f32[16,1], index: 3, kind: input, shape index: {}]
  %s4 = inlined_call_operand.vmem [shape: f32[16,1], index: 4, kind: input, shape index: {}]
  %s5 = inlined_call_operand.<no memory space> [shape: f32[1,1], index: 5, kind: input, shape index: {}]
  %s6 = inlined_call_operand.hbm [shape: f32[1,256], index: 6, kind: output, shape index: {}]
  %s7 = sld [smem:[#allocation0]]
  $region57: #{tpu_custom_call.1} parent=0
    _
  %s9 = ssub.s32 1, %s7
  %s10 = scalar_select 0, %s9, %s7
  %11 = sst [smem:[#allocation2]] %s5
  $region1: #{tpu_custom_call.1} parent=0
    #allocation3 [shape = 'u8[1024]{0}', space=vmem, size = 0x400, scoped, tag = 'output window, operand 0']
    #allocation4 [shape = 's32[2]{0}', space=sflag, size = 0x8, scoped, tag = 'scoped memory for tpu_custom_call.1']
    %12 = vsyncpa [#allocation4], 0
    %s13 = scalar_lea.sflag [#allocation4], 1
    %14 = vsyncpa %s13, 0
    loop: start=0, step=1, limit=4
    $region2: #{tpu_custom_call.1} parent=1 // loop_pre_header
      _
    $region3: #{tpu_custom_call.1} parent=1 // loop_header
      %s16 = sphi 0, %s20
      %p17 = scmp.ge.s32.totalorder %s16, 4
      %s26 = sphi 0, %s28
      %s29 = sphi 0, %s26
      %s30 = sphi 0, %s29
      %s46 = sphi 0, %s30
      %s52 = sphi 0, %s54
      %s55 = sphi 0, %s52
      %s56 = sphi 0, %s55
      %s72 = sphi 0, %s56
      %s76 = sphi 0, %s76
      %s78 = sphi 0, %s76
      %s79 = sphi 0, %s78
      %s93 = sphi 0, %s79
      %s97 = sphi 0, %s97
      %s99 = sphi 0, %s97
      %s100 = sphi 0, %s99
      %s114 = sphi 0, %s100
      %s118 = sphi 0, %s118
      %s120 = sphi 0, %s118
      %s121 = sphi 0, %s120
      %s135 = sphi 0, %s121
      %s139 = sphi 0, %s139
      %s141 = sphi 0, %s139
      %s142 = sphi 0, %s141
      %s156 = sphi 0, %s142
      %s162 = sphi 0, %s164
      %s165 = sphi 0, %s162
      %s166 = sphi 0, %s165
      %s182 = sphi 0, %s166
    $region4: #{tpu_custom_call.1} parent=1 // loop_header_branch
      %19 = sbr.rel (%p17) target = $region8
    $region5: #{tpu_custom_call.1} parent=1 // loop_body
      %s21 = ssub.s32 %s16, 1
      %s22 = ssub.s32 %s16, 2
      %s23 = sadd.s32 %s16, 1
      %s24 = ssub.s32 %s16, %s23
      %p25 = scmp.eq.s32.totalorder %s24, 0
      %s27 = sadd.s32 %s26, 1
      %s28 = scalar_select %p25, %s26, %s27
      %p31 = pneg %p25
      %p32 = scmp.eq.s32.totalorder %s16, 1
      %p33 = por %p31, %p32
      %p34 = scmp.ne.s32.totalorder %s26, %s29
      %p35 = scmp.eq.s32.totalorder %s16, 0
      %p36 = por %p34, %p35
      %p37 = scmp.ne.s32.totalorder %s26, %s29
      %p38 = scmp.eq.s32.totalorder %s21, 1
      %p39 = por %p37, %p38
      %p40 = scmp.ne.s32.totalorder %s29, %s30
      %p41 = scmp.eq.s32.totalorder %s21, 0
      %p42 = por %p40, %p41
      %p43 = scmp.ne.s32.totalorder %s29, %s30
      %p44 = scmp.eq.s32.totalorder %s22, 1
      %p45 = por %p43, %p44
      %p47 = scmp.ne.s32.totalorder %s30, %s46
      %p48 = scmp.eq.s32.totalorder %s22, 0
      %p49 = por %p47, %p48
      %s50 = ssub.s32 %s16, %s23
      %p51 = scmp.eq.s32.totalorder %s50, 0
      %s53 = sadd.s32 %s52, 1
      %s54 = scalar_select %p51, %s52, %s53
      %p57 = pneg %p51
      %p58 = scmp.eq.s32.totalorder %s16, 1
      %p59 = por %p57, %p58
      %p60 = scmp.ne.s32.totalorder %s52, %s55
      %p61 = scmp.eq.s32.totalorder %s16, 0
      %p62 = por %p60, %p61
      %p63 = scmp.ne.s32.totalorder %s52, %s55
      %p64 = scmp.eq.s32.totalorder %s21, 1
      %p65 = por %p63, %p64
      %p66 = scmp.ne.s32.totalorder %s55, %s56
      %p67 = scmp.eq.s32.totalorder %s21, 0
      %p68 = por %p66, %p67
      %p69 = scmp.ne.s32.totalorder %s55, %s56
      %p70 = scmp.eq.s32.totalorder %s22, 1
      %p71 = por %p69, %p70
      %p73 = scmp.ne.s32.totalorder %s56, %s72
      %p74 = scmp.eq.s32.totalorder %s22, 0
      %p75 = por %p73, %p74
      %s77 = sadd.s32 %s76, 1
      %p80 = scmp.eq.s32.totalorder %s16, 1
      %p81 = scmp.ne.s32.totalorder %s76, %s78
      %p82 = scmp.eq.s32.totalorder %s16, 0
      %p83 = por %p81, %p82
      %p84 = scmp.ne.s32.totalorder %s76, %s78
      %p85 = scmp.eq.s32.totalorder %s21, 1
      %p86 = por %p84, %p85
      %p87 = scmp.ne.s32.totalorder %s78, %s79
      %p88 = scmp.eq.s32.totalorder %s21, 0
      %p89 = por %p87, %p88
      %p90 = scmp.ne.s32.totalorder %s78, %s79
      %p91 = scmp.eq.s32.totalorder %s22, 1
      %p92 = por %p90, %p91
      %p94 = scmp.ne.s32.totalorder %s79, %s93
      %p95 = scmp.eq.s32.totalorder %s22, 0
      %p96 = por %p94, %p95
      %s98 = sadd.s32 %s97, 1
      %p101 = scmp.eq.s32.totalorder %s16, 1
      %p102 = scmp.ne.s32.totalorder %s97, %s99
      %p103 = scmp.eq.s32.totalorder %s16, 0
      %p104 = por %p102, %p103
      %p105 = scmp.ne.s32.totalorder %s97, %s99
      %p106 = scmp.eq.s32.totalorder %s21, 1
      %p107 = por %p105, %p106
      %p108 = scmp.ne.s32.totalorder %s99, %s100
      %p109 = scmp.eq.s32.totalorder %s21, 0
      %p110 = por %p108, %p109
      %p111 = scmp.ne.s32.totalorder %s99, %s100
      %p112 = scmp.eq.s32.totalorder %s22, 1
      %p113 = por %p111, %p112
      %p115 = scmp.ne.s32.totalorder %s100, %s114
      %p116 = scmp.eq.s32.totalorder %s22, 0
      %p117 = por %p115, %p116
      %s119 = sadd.s32 %s118, 1
      %p122 = scmp.eq.s32.totalorder %s16, 1
      %p123 = scmp.ne.s32.totalorder %s118, %s120
      %p124 = scmp.eq.s32.totalorder %s16, 0
      %p125 = por %p123, %p124
      %p126 = scmp.ne.s32.totalorder %s118, %s120
      %p127 = scmp.eq.s32.totalorder %s21, 1
      %p128 = por %p126, %p127
      %p129 = scmp.ne.s32.totalorder %s120, %s121
      %p130 = scmp.eq.s32.totalorder %s21, 0
      %p131 = por %p129, %p130
      %p132 = scmp.ne.s32.totalorder %s120, %s121
      %p133 = scmp.eq.s32.totalorder %s22, 1
      %p134 = por %p132, %p133
      %p136 = scmp.ne.s32.totalorder %s121, %s135
      %p137 = scmp.eq.s32.totalorder %s22, 0
      %p138 = por %p136, %p137
      %s140 = sadd.s32 %s139, 1
      %p143 = scmp.eq.s32.totalorder %s16, 1
      %p144 = scmp.ne.s32.totalorder %s139, %s141
      %p145 = scmp.eq.s32.totalorder %s16, 0
      %p146 = por %p144, %p145
      %p147 = scmp.ne.s32.totalorder %s139, %s141
      %p148 = scmp.eq.s32.totalorder %s21, 1
      %p149 = por %p147, %p148
      %p150 = scmp.ne.s32.totalorder %s141, %s142
      %p151 = scmp.eq.s32.totalorder %s21, 0
      %p152 = por %p150, %p151
      %p153 = scmp.ne.s32.totalorder %s141, %s142
      %p154 = scmp.eq.s32.totalorder %s22, 1
      %p155 = por %p153, %p154
      %p157 = scmp.ne.s32.totalorder %s142, %s156
      %p158 = scmp.eq.s32.totalorder %s22, 0
      %p159 = por %p157, %p158
      %s160 = ssub.s32 %s16, %s23
      %p161 = scmp.eq.s32.totalorder %s160, 0
      %s163 = sadd.s32 %s162, 1
      %s164 = scalar_select %p161, %s162, %s163
      %p167 = pneg %p161
      %p168 = scmp.eq.s32.totalorder %s16, 1
      %p169 = por %p167, %p168
      %p170 = scmp.ne.s32.totalorder %s162, %s165
      %p171 = scmp.eq.s32.totalorder %s16, 0
      %p172 = por %p170, %p171
      %p173 = scmp.ne.s32.totalorder %s162, %s165
      %p174 = scmp.eq.s32.totalorder %s21, 1
      %p175 = por %p173, %p174
      %p176 = scmp.ne.s32.totalorder %s165, %s166
      %p177 = scmp.eq.s32.totalorder %s21, 0
      %p178 = por %p176, %p177
      %p179 = scmp.ne.s32.totalorder %s165, %s166
      %p180 = scmp.eq.s32.totalorder %s22, 1
      %p181 = por %p179, %p180
      %p183 = scmp.ne.s32.totalorder %s166, %s182
      %p184 = scmp.eq.s32.totalorder %s22, 0
      %p185 = por %p183, %p184
      %p186 = scmp.le.s32.totalorder 1, %s16
      %p187 = scmp.lt.s32.totalorder %s16, 3
      %p188 = pnand %p186, %p187
      %p189 = pneg %p188
      // Predicated region
      $region9: #{tpu_custom_call.1} parent=5 // pred_check
        _
      $region10: #{tpu_custom_call.1} parent=5 // pred_check_branch
        %191 = sbr.rel (%p188) target = $region12
      $region11: #{tpu_custom_call.1} parent=5 // pred_region
        %s192 = ssub.s32 %s16, 1
        // Predicated region
        $region13: #{tpu_custom_call.1} parent=11 // pred_check
          %p193 = pneg %p89
        $region14: #{tpu_custom_call.1} parent=11 // pred_check_branch
          %195 = sbr.rel (%p193) target = $region16
        $region15: #{tpu_custom_call.1} parent=11 // pred_region
          _
        $region16: #{tpu_custom_call.1} parent=11 // pred_fallthru
          _
        // Predicated region
        $region17: #{tpu_custom_call.1} parent=11 // pred_check
          %p196 = pneg %p110
        $region18: #{tpu_custom_call.1} parent=11 // pred_check_branch
          %198 = sbr.rel (%p196) target = $region20
        $region19: #{tpu_custom_call.1} parent=11 // pred_region
          _
        $region20: #{tpu_custom_call.1} parent=11 // pred_fallthru
          _
        // Predicated region
        $region21: #{tpu_custom_call.1} parent=11 // pred_check
          %p199 = pneg %p131
        $region22: #{tpu_custom_call.1} parent=11 // pred_check_branch
          %201 = sbr.rel (%p199) target = $region24
        $region23: #{tpu_custom_call.1} parent=11 // pred_region
          _
        $region24: #{tpu_custom_call.1} parent=11 // pred_fallthru
          _
        // Predicated region
        $region25: #{tpu_custom_call.1} parent=11 // pred_check
          %p202 = pneg %p152
        $region26: #{tpu_custom_call.1} parent=11 // pred_check_branch
          %204 = sbr.rel (%p202) target = $region28
        $region27: #{tpu_custom_call.1} parent=11 // pred_region
          _
        $region28: #{tpu_custom_call.1} parent=11 // pred_fallthru
          _
      $region12: #{tpu_custom_call.1} parent=5 // pred_fallthru
        _
      %p205 = scmp.lt.s32.totalorder %s16, 2
      // Predicated region
      $region29: #{tpu_custom_call.1} parent=5 // pred_check
        %p206 = pneg %p205
      $region30: #{tpu_custom_call.1} parent=5 // pred_check_branch
        %208 = sbr.rel (%p206) target = $region32
      $region31: #{tpu_custom_call.1} parent=5 // pred_region
        // Predicated region
        $region33: #{tpu_custom_call.1} parent=31 // pred_check
          %p209 = pneg %p36
        $region34: #{tpu_custom_call.1} parent=31 // pred_check_branch
          %211 = sbr.rel (%p209) target = $region36
        $region35: #{tpu_custom_call.1} parent=31 // pred_region
          %s212 = smul.u32 16, %s16
          %p213 = scmp.lt.s32.totalorder %s212, 31
          %s214 = scalar_select %p213, %s212, 31
          %s215 = smul.addr %s214, 8
          %s216 = scalar_lea.vmem %s0, %s215
          %s217 = smul.u32 16, %s16
        $region36: #{tpu_custom_call.1} parent=31 // pred_fallthru
          _
        // Predicated region
        $region37: #{tpu_custom_call.1} parent=31 // pred_check
          %p218 = pneg %p62
        $region38: #{tpu_custom_call.1} parent=31 // pred_check_branch
          %220 = sbr.rel (%p218) target = $region40
        $region39: #{tpu_custom_call.1} parent=31 // pred_region
          %s221 = smul.u32 16, %s16
          %p222 = scmp.lt.s32.totalorder %s221, 31
          %s223 = scalar_select %p222, %s221, 31
          %s224 = smul.addr %s223, 8
          %s225 = scalar_lea.vmem %s1, %s224
          %s226 = smul.u32 16, %s16
        $region40: #{tpu_custom_call.1} parent=31 // pred_fallthru
          _
      $region32: #{tpu_custom_call.1} parent=5 // pred_fallthru
        _
      %p227 = scmp.le.s32.totalorder 1, %s16
      %p228 = scmp.lt.s32.totalorder %s16, 3
      %p229 = pnand %p227, %p228
      %p230 = pneg %p229
      // Predicated region
      $region41: #{tpu_custom_call.1} parent=5 // pred_check
        _
      $region42: #{tpu_custom_call.1} parent=5 // pred_check_branch
        %232 = sbr.rel (%p229) target = $region44
      $region43: #{tpu_custom_call.1} parent=5 // pred_region
        %s233 = ssub.s32 %s16, 1
        %s234 = smul.u32 16, %s21
        %p235 = scmp.lt.s32.totalorder %s234, 31
        %s236 = scalar_select %p235, %s234, 31
        %s237 = smul.addr %s236, 8
        %s238 = scalar_lea.vmem %s0, %s237
        %p239 = pneg %p42
        %p240 = pneg %p39
        %s241 = smul.u32 16, %s21
        %p242 = scmp.lt.s32.totalorder %s241, 31
        %s243 = scalar_select %p242, %s241, 31
        %s244 = smul.addr %s243, 8
        %s245 = scalar_lea.vmem %s1, %s244
        %p246 = pneg %p68
        %p247 = pneg %p65
        %p248 = pneg %p89
        %p249 = pneg %p86
        %p250 = pneg %p110
        %p251 = pneg %p107
        %p252 = pneg %p131
        %p253 = pneg %p128
        %p254 = pneg %p152
        %p255 = pneg %p149
        %p256 = pneg %p178
        %p257 = pneg %p175
        %s258 = sand.u32 %s165, 1
        %s259 = scalar_lea.sflag [#allocation4], %s258
        %s260 = sand.u32 %s165, 1
        %s261 = scalar_lea.vmem [#allocation3], %s260
        %s262 = smul.u32 16, %s21
        %p263 = scmp.lt.s32.totalorder %s262, 31
        %s264 = scalar_select %p263, %s262, 31
        %s265 = smul.addr %s264, 8
        %s266 = scalar_lea.vmem %s0, %s265
        %s267 = smul.u32 16, %s21
        %s268 = smul.u32 16, %s21
        %p269 = scmp.lt.s32.totalorder %s268, 31
        %s270 = scalar_select %p269, %s268, 31
        %s271 = smul.addr %s270, 8
        %s272 = scalar_lea.vmem %s1, %s271
        %s273 = smul.u32 16, %s21
        %v274 = vld [vmem:[%s266] sm:$0xff]
        %v275 = vld [vmem:[%s266 + $0x8] sm:$0xff]
        %v276 = vld [vmem:[%s266 + $0x10] sm:$0xff]
        %v277 = vld [vmem:[%s266 + $0x18] sm:$0xff]
        %v278 = vld [vmem:[%s266 + $0x20] sm:$0xff]
        %v279 = vld [vmem:[%s266 + $0x28] sm:$0xff]
        %v280 = vld [vmem:[%s266 + $0x30] sm:$0xff]
        %v281 = vld [vmem:[%s266 + $0x38] sm:$0xff]
        %v282 = vld [vmem:[%s266 + $0x40] sm:$0xff]
        %v283 = vld [vmem:[%s266 + $0x48] sm:$0xff]
        %v284 = vld [vmem:[%s266 + $0x50] sm:$0xff]
        %v285 = vld [vmem:[%s266 + $0x58] sm:$0xff]
        %v286 = vld [vmem:[%s266 + $0x60] sm:$0xff]
        %v287 = vld [vmem:[%s266 + $0x68] sm:$0xff]
        %v288 = vld [vmem:[%s266 + $0x70] sm:$0xff]
        %v289 = vld [vmem:[%s266 + $0x78] sm:$0xff]
        %v290 = vld [vmem:[%s272] sm:$0xff]
        %v291 = vld [vmem:[%s272 + $0x8] sm:$0xff]
        %v292 = vld [vmem:[%s272 + $0x10] sm:$0xff]
        %v293 = vld [vmem:[%s272 + $0x18] sm:$0xff]
        %v294 = vld [vmem:[%s272 + $0x20] sm:$0xff]
        %v295 = vld [vmem:[%s272 + $0x28] sm:$0xff]
        %v296 = vld [vmem:[%s272 + $0x30] sm:$0xff]
        %v297 = vld [vmem:[%s272 + $0x38] sm:$0xff]
        %v298 = vld [vmem:[%s272 + $0x40] sm:$0xff]
        %v299 = vld [vmem:[%s272 + $0x48] sm:$0xff]
        %v300 = vld [vmem:[%s272 + $0x50] sm:$0xff]
        %v301 = vld [vmem:[%s272 + $0x58] sm:$0xff]
        %v302 = vld [vmem:[%s272 + $0x60] sm:$0xff]
        %v303 = vld [vmem:[%s272 + $0x68] sm:$0xff]
        %v304 = vld [vmem:[%s272 + $0x70] sm:$0xff]
        %v305 = vld [vmem:[%s272 + $0x78] sm:$0xff]
        %v306 = vsub.f32 %v274, %v290
        %v307 = vsub.f32 %v275, %v291
        %v308 = vsub.f32 %v276, %v292
        %v309 = vsub.f32 %v277, %v293
        %v310 = vsub.f32 %v278, %v294
        %v311 = vsub.f32 %v279, %v295
        %v312 = vsub.f32 %v280, %v296
        %v313 = vsub.f32 %v281, %v297
        %v314 = vsub.f32 %v282, %v298
        %v315 = vsub.f32 %v283, %v299
        %v316 = vsub.f32 %v284, %v300
        %v317 = vsub.f32 %v285, %v301
        %v318 = vsub.f32 %v286, %v302
        %v319 = vsub.f32 %v287, %v303
        %v320 = vsub.f32 %v288, %v304
        %v321 = vsub.f32 %v289, %v305
        %v322 = vld [vmem:[%s2] sm:$0xff]
        %v323 = vld [vmem:[%s2 + $0x8] sm:$0xff]
        %v324 = vld [vmem:[%s3] sm:$0xff]
        %v325 = vld [vmem:[%s3 + $0x8] sm:$0xff]
        %327 = vset.pattern.permute.xlu0 0
        %328 = vperm.xlu0 %327, %v324
        %v329 = vpop.permute.xlu0 %328
        %332 = vset.pattern.permute.xlu0 0
        %333 = vperm.xlu0 %332, %v325
        %v334 = vpop.permute.xlu0 %333
        %vm336 = vcmask 261120
        %v338 = vsel %vm336, %v322, 0
        %v341 = vsel %vm336, %v323, 0
        %v344 = vsel %vm336, %v306, 0
        %v347 = vsel %vm336, %v307, 0
        %v350 = vsel %vm336, %v308, 0
        %v353 = vsel %vm336, %v309, 0
        %v356 = vsel %vm336, %v310, 0
        %v359 = vsel %vm336, %v311, 0
        %v362 = vsel %vm336, %v312, 0
        %v365 = vsel %vm336, %v313, 0
        %v368 = vsel %vm336, %v314, 0
        %v371 = vsel %vm336, %v315, 0
        %v374 = vsel %vm336, %v316, 0
        %v377 = vsel %vm336, %v317, 0
        %v380 = vsel %vm336, %v318, 0
        %v383 = vsel %vm336, %v319, 0
        %v386 = vsel %vm336, %v320, 0
        %v389 = vsel %vm336, %v321, 0
        %391 = vmatprep.subr.mxu0 0.0
        %392 = vmatpush1.xpose.msra.mxu0 %v344
        %393 = vmatprep.subr.mxu0 0.0
        %394 = vmatpush1.xpose.msra.mxu0 %v347
        %395 = vmatprep.subr.mxu0 0.0
        %396 = vmatpush1.xpose.msra.mxu0 %v350
        %397 = vmatprep.subr.mxu0 0.0
        %398 = vmatpush1.xpose.msra.mxu0 %v353
        %399 = vmatprep.subr.mxu0 0.0
        %400 = vmatpush1.xpose.msra.mxu0 %v356
        %401 = vmatprep.subr.mxu0 0.0
        %402 = vmatpush1.xpose.msra.mxu0 %v359
        %403 = vmatprep.subr.mxu0 0.0
        %404 = vmatpush1.xpose.msra.mxu0 %v362
        %405 = vmatprep.subr.mxu0 0.0
        %406 = vmatpush1.xpose.msra.mxu0 %v365
        %407 = vmatprep.subr.mxu0 0.0
        %408 = vmatpush1.xpose.msra.mxu0 %v368
        %409 = vmatprep.subr.mxu0 0.0
        %410 = vmatpush1.xpose.msra.mxu0 %v371
        %411 = vmatprep.subr.mxu0 0.0
        %412 = vmatpush1.xpose.msra.mxu0 %v374
        %413 = vmatprep.subr.mxu0 0.0
        %414 = vmatpush1.xpose.msra.mxu0 %v377
        %415 = vmatprep.subr.mxu0 0.0
        %416 = vmatpush1.xpose.msra.mxu0 %v380
        %417 = vmatprep.subr.mxu0 0.0
        %418 = vmatpush1.xpose.msra.mxu0 %v383
        %419 = vmatprep.subr.mxu0 0.0
        %420 = vmatpush1.xpose.msra.mxu0 %v386
        %421 = vmatprep.subr.mxu0 0.0
        %422 = vmatpush1.xpose.msra.mxu0 %v389
        %423 = vmatprep.subr.mxu0 0.0
        %424 = vmatpush1.xpose.msra.mxu0 0.0
        %425 = vmatprep.subr.mxu0 0.0
        %426 = vmatpush1.xpose.msra.mxu0 0.0
        %427 = vmatprep.subr.mxu0 0.0
        %428 = vmatpush1.xpose.msra.mxu0 0.0
        %429 = vmatprep.subr.mxu0 0.0
        %430 = vmatpush1.xpose.msra.mxu0 0.0
        %431 = vmatprep.subr.mxu0 0.0
        %432 = vmatpush1.xpose.msra.mxu0 0.0
        %433 = vmatprep.subr.mxu0 0.0
        %434 = vmatpush1.xpose.msra.mxu0 0.0
        %435 = vmatprep.subr.mxu0 0.0
        %436 = vmatpush1.xpose.msra.mxu0 0.0
        %437 = vmatprep.subr.mxu0 0.0
        %438 = vmatpush1.xpose.msra.mxu0 0.0
        %439 = vmatprep.subr.mxu0 0.0
        %440 = vmatpush1.xpose.msra.mxu0 0.0
        %441 = vmatprep.subr.mxu0 0.0
        %442 = vmatpush1.xpose.msra.mxu0 0.0
        %443 = vmatprep.subr.mxu0 0.0
        %444 = vmatpush1.xpose.msra.mxu0 0.0
        %445 = vmatprep.subr.mxu0 0.0
        %446 = vmatpush1.xpose.msra.mxu0 0.0
        %447 = vmatprep.subr.mxu0 0.0
        %448 = vmatpush1.xpose.msra.mxu0 0.0
        %449 = vmatprep.subr.mxu0 0.0
        %450 = vmatpush1.xpose.msra.mxu0 0.0
        %451 = vmatprep.subr.mxu0 0.0
        %452 = vmatpush1.xpose.msra.mxu0 0.0
        %453 = vmatprep.subr.mxu0 0.0
        %454 = vmatpush1.xpose.msra.mxu0 0.0
        %455 = vmatprep.mubr.f32.mxu0 0.0
        %456 = vmatmul.mubr.f32.gmra.mrb[0].mxu0 %v338
        %v457 = vpop.f32.mrb[0].mxu0
        %v458 = vadd.f32 %v329, %v457
        %v459 = vpop.f32.mrb[0].mxu0
        %460 = vmatprep.mubr.f32.mxu0 0.0
        %461 = vmatmul.mubr.f32.gmra.mrb[0].mxu0 %v341
        %v462 = vpop.f32.mrb[0].mxu0
        %v463 = vadd.f32 %v334, %v462
        %v464 = vpop.f32.mrb[0].mxu0
        %465 = vdwg.mxu0
        %v466 = vadd.f32 %v458, %v463
        %v467 = vrot.slane %v466, 4
        %v468 = vadd.f32 %v466, %v467
        %v469 = vrot.slane %v468, 2
        %v470 = vadd.f32 %v468, %v469
        %v471 = vrot.slane %v470, 1
        %v472 = vadd.f32 %v470, %v471
        %v473 = vrcp.pop 16.0
        %v474 = vmul.f32 %v472, %v473
        %v475 = vsub.f32 %v458, %v474
        %v476 = vsub.f32 %v463, %v474
        %v477 = vmul.f32 %v475, %v475
        %v478 = vmul.f32 %v476, %v476
        %v479 = vadd.f32 %v477, %v478
        %v480 = vrot.slane %v479, 4
        %v481 = vadd.f32 %v479, %v480
        %v482 = vrot.slane %v481, 2
        %v483 = vadd.f32 %v481, %v482
        %v484 = vrot.slane %v483, 1
        %v485 = vadd.f32 %v483, %v484
        %v486 = vmul.f32 %v485, %v473
        %v487 = vld [vmem:[%s4] sm:$0xff]
        %v488 = vld [vmem:[%s4 + $0x8] sm:$0xff]
        %490 = vset.pattern.permute.xlu0 0
        %491 = vperm.xlu0 %490, %v487
        %v492 = vpop.permute.xlu0 %491
        %495 = vset.pattern.permute.xlu0 0
        %496 = vperm.xlu0 %495, %v488
        %v497 = vpop.permute.xlu0 %496
        %v499 = vmul.f32 %v475, %v492
        %v500 = vmul.f32 %v476, %v497
        %v501 = vadd.f32 %v499, %v500
        %v502 = vrot.slane %v501, 4
        %v503 = vadd.f32 %v501, %v502
        %v504 = vrot.slane %v503, 2
        %v505 = vadd.f32 %v503, %v504
        %v506 = vrot.slane %v505, 1
        %v507 = vadd.f32 %v505, %v506
        %v508 = vadd.f32 %v486, 1e-05
        %v509 = vrsqrt.pop %v508
        %v510 = vmul.f32 %v507, %v509
        %s511 = sld [smem:[#allocation2]]
        %v512 = vstv %s511
        %v513 = vadd.f32 %v510, %v512
        %v514 = vxor.u32 %v513, 2147483648
        %v515 = vmul.f32 %v514, 1.442695
        %v516 = vpow.pop %v515
        %v517 = vadd.f32 %v516, 1.0
        %v518 = vrcp.pop %v517
        %v519 = vmul.f32 1.0, %v518
        %520 = vst [vmem:[%s261] sm:$0x1] %v519
        %s521 = sand.u32 %s165, 1
        %s522 = scalar_lea.sflag [#allocation4], %s521
        %s523 = sand.u32 %s165, 1
        %s524 = scalar_lea.vmem [#allocation3], %s523
        // Predicated region
        $region45: #{tpu_custom_call.1} parent=43 // pred_check
          %p525 = pneg %p175
        $region46: #{tpu_custom_call.1} parent=43 // pred_check_branch
          %527 = sbr.rel (%p525) target = $region48
        $region47: #{tpu_custom_call.1} parent=43 // pred_region
          %s529 = ssub.s32 16, 16
          %530 = vsyncadd %s522, %s529
          %s531 = smul.addr %s21, 16
          %s532 = scalar_lea.hbm %s6, %s531
          %s534 = sshll.u32 %s524, 4
          %s535 = int_to_ptr.vmem [resolvable:$true] %s534
          %537 = dma.vmem_to_hbm [thread:$0]  %s535, 16, %s532, %s522
        $region48: #{tpu_custom_call.1} parent=43 // pred_fallthru
          _
      $region44: #{tpu_custom_call.1} parent=5 // pred_fallthru
        _
      %p538 = scmp.le.s32.totalorder 2, %s16
      // Predicated region
      $region49: #{tpu_custom_call.1} parent=5 // pred_check
        %p539 = pneg %p538
      $region50: #{tpu_custom_call.1} parent=5 // pred_check_branch
        %541 = sbr.rel (%p539) target = $region52
      $region51: #{tpu_custom_call.1} parent=5 // pred_region
        %s542 = ssub.s32 %s16, 2
        // Predicated region
        $region53: #{tpu_custom_call.1} parent=51 // pred_check
          %p543 = pneg %p181
        $region54: #{tpu_custom_call.1} parent=51 // pred_check_branch
          %545 = sbr.rel (%p543) target = $region56
        $region55: #{tpu_custom_call.1} parent=51 // pred_region
          %s546 = sand.u32 %s166, 1
          %s547 = scalar_lea.sflag [#allocation4], %s546
          %s548 = sand.u32 %s166, 1
          %s549 = scalar_lea.vmem [#allocation3], %s548
          %550 = dma.done %s547, 16
        $region56: #{tpu_custom_call.1} parent=51 // pred_fallthru
          _
      $region52: #{tpu_custom_call.1} parent=5 // pred_fallthru
        _
    $region6: #{tpu_custom_call.1} parent=1 // loop_footer
      %s20 = sadd.s32 1, %s16
    $region7: #{tpu_custom_call.1} parent=1 // loop_footer_branch
      %15 = sbr.rel target = $region3
    $region8: #{tpu_custom_call.1} parent=1 // loop_exit
      _
    %551 = vsyncpa [#allocation4], 1
    %s552 = scalar_lea.sflag [#allocation4], 1
    %553 = vsyncpa %s552, 1

</llo_original>
